<compile_context>
chip_gen: v7x
topology: tpu7x:2x2x1
jax: 0.10.0
libtpu: 0.0.40
codegen_flags: <defaults>
</compile_context>

<pallas_src>
import functools
import math

import jax
import jax.numpy as jnp
from jax.experimental import pallas as pl
from jax.experimental.pallas import tpu as pltpu


def _softmax_matmul(scores, v, o_ref, w_ref):
    """Stable softmax over the last axis of `scores` (f32) then @ V."""
    row_max = jnp.max(scores, axis=-1, keepdims=True)          # [tq, 1]
    p = jnp.exp(scores - row_max)                               # [tq, S]
    denom = jnp.sum(p, axis=-1, keepdims=True)                  # [tq, 1]
    w = p * pl.reciprocal(denom, approx=False)                  # [tq, S]
    o = jnp.dot(w.astype(v.dtype), v,
                preferred_element_type=jnp.float32)             # [tq, d_k]
    o_ref[0] = o.astype(o_ref.dtype)
    w_ref[0] = w.astype(w_ref.dtype)


def _sdpa_kernel_masked(q_ref, k_ref, v_ref, m_ref, o_ref, w_ref, *, scale):
    # q_ref: [1, tq, d_k], k_ref/v_ref: [1, S, d_k], m_ref: [1, tq, S]
    q, k, v = q_ref[0], k_ref[0], v_ref[0]
    scores = jax.lax.dot_general(
        q, k, (((1,), (1,)), ((), ())),
        preferred_element_type=jnp.float32) * scale             # [tq, S] f32
    scores = jnp.where(m_ref[0] == 0.0, jnp.float32(-1e9), scores)
    _softmax_matmul(scores, v, o_ref, w_ref)


def _sdpa_kernel_nomask(q_ref, k_ref, v_ref, o_ref, w_ref, *, scale):
    q, k, v = q_ref[0], k_ref[0], v_ref[0]
    scores = jax.lax.dot_general(
        q, k, (((1,), (1,)), ((), ())),
        preferred_element_type=jnp.float32) * scale             # [tq, S] f32
    _softmax_matmul(scores, v, o_ref, w_ref)


def _pick_q_tile(s, max_tile=512):
    """Largest power-of-two (>=8) query tile that divides s; else full s."""
    for t in (512, 256, 128, 64, 32, 16, 8):
        if t <= max_tile and s % t == 0:
            return t
    return s


def scaled_dot_product_attention(query, key, value, mask=None, *, q_tile=None):
    """query/key/value: [B, H, S, d_k]; mask broadcastable to [B, H, S, S].

    Returns (output [B, H, S, d_k], attn_weights [B, H, S, S])."""
    b, h, s, d_k = query.shape
    scale = 1.0 / math.sqrt(d_k)
    bh = b * h

    q = query.reshape(bh, s, d_k)
    k = key.reshape(bh, s, d_k)
    v = value.reshape(bh, s, d_k)

    tq = q_tile if q_tile is not None else _pick_q_tile(s)
    if s % tq != 0:
        tq = s  # only hit for odd seq lengths not divisible by 8
    grid = (bh, s // tq)

    in_arrays = [q, k, v]
    in_specs = [
        pl.BlockSpec((1, tq, d_k), lambda g, i: (g, i, 0)),   # Q tile
        pl.BlockSpec((1, s, d_k), lambda g, i: (g, 0, 0)),    # K full (per head)
        pl.BlockSpec((1, s, d_k), lambda g, i: (g, 0, 0)),    # V full (per head)
    ]

    itemsize = jnp.dtype(query.dtype).itemsize
    bytes_accessed = (3 * bh * s * d_k + 2 * bh * s * s) * itemsize

    if mask is None:
        kernel = functools.partial(_sdpa_kernel_nomask, scale=scale)
    else:
        m = jnp.asarray(mask)
        if m.ndim < 4:
            m = m.reshape((1,) * (4 - m.ndim) + m.shape)
        mb, mh, mq, mk = m.shape
        if (mq, mk) != (s, s):
            m = jnp.broadcast_to(m, (mb, mh, s, s))
        m = m.reshape(mb * mh, s, s).astype(jnp.float32)

        # Broadcast over batch / head is expressed in the index_map (no
        # [BH,S,S] materialization in HBM).
        if mb == b and mh == h:
            m_idx = lambda g, i: (g, i, 0)
        elif mb == 1 and mh == 1:
            m_idx = lambda g, i: (0, i, 0)
        elif mh == 1:                       # per-batch mask, shared over heads
            m_idx = lambda g, i: (g // h, i, 0)
        else:                               # per-head mask, shared over batch
            m_idx = lambda g, i: (g % h, i, 0)

        in_arrays.append(m)
        in_specs.append(pl.BlockSpec((1, tq, s), m_idx))      # mask tile
        bytes_accessed += m.size * 4
        kernel = functools.partial(_sdpa_kernel_masked, scale=scale)

    cost = pl.CostEstimate(
        flops=4 * bh * s * s * d_k,          # two matmuls
        transcendentals=bh * s * s,          # exp
        bytes_accessed=bytes_accessed,
    )

    out, weights = pl.pallas_call(
        kernel,
        out_shape=(
            jax.ShapeDtypeStruct((bh, s, d_k), query.dtype),
            jax.ShapeDtypeStruct((bh, s, s), query.dtype),
        ),
        grid_spec=pltpu.PrefetchScalarGridSpec(
            num_scalar_prefetch=0,
            grid=grid,
            in_specs=in_specs,
            out_specs=[
                pl.BlockSpec((1, tq, d_k), lambda g, i: (g, i, 0)),   # output
                pl.BlockSpec((1, tq, s), lambda g, i: (g, i, 0)),     # weights
            ],
        ),
        compiler_params=pltpu.CompilerParams(
            dimension_semantics=("parallel", "parallel"),
        ),
        cost_estimate=cost,
    )(*in_arrays)

    return out.reshape(b, h, s, d_k), weights.reshape(b, h, s, s)


def _reference(query, key, value, mask, scale):
    scores = jnp.einsum("bhqd,bhkd->bhqk", query, key) * scale
    if mask is not None:
        scores = jnp.where(mask == 0, -1e9, scores)
    w = jax.nn.softmax(scores, axis=-1)
    out = jnp.einsum("bhqk,bhkd->bhqd", w, value)
    return out, w


if __name__ == "__main__":
    batch, n_heads, seq_len, d_k = 2, 2, 8, 32

    root = jax.random.PRNGKey(0)
    kq, kk, kv = jax.random.split(root, 3)
    q = jax.random.normal(kq, (batch, n_heads, seq_len, d_k), dtype=jnp.float32)
    k = jax.random.normal(kk, (batch, n_heads, seq_len, d_k), dtype=jnp.float32)
    v = jax.random.normal(kv, (batch, n_heads, seq_len, d_k), dtype=jnp.float32)

    scale = 1.0 / math.sqrt(d_k)

    # 1) causal mask, broadcast over batch & heads: [1, 1, S, S]
    causal = jnp.tril(jnp.ones((seq_len, seq_len), dtype=jnp.float32))
    mask = causal[None, None, :, :]
    out, w = scaled_dot_product_attention(q, k, v, mask)
    out = jax.block_until_ready(out)
    w = jax.block_until_ready(w)
    ref_out, ref_w = _reference(q, k, v, mask, scale)
    assert out.shape == (batch, n_heads, seq_len, d_k)
    assert w.shape == (batch, n_heads, seq_len, seq_len)
    assert jnp.allclose(out, ref_out, atol=1e-5, rtol=1e-5), "output mismatch (causal)"
    assert jnp.allclose(w, ref_w, atol=1e-5, rtol=1e-5), "weights mismatch (causal)"

    # 2) per-batch padding-style mask, broadcast over heads: [B, 1, S, S]
    key_valid = (jnp.arange(seq_len)[None, :] < jnp.array([6, 8])[:, None])
    pad_mask = key_valid[:, None, None, :].astype(jnp.float32)        # [B,1,1,S]
    pad_mask = jnp.broadcast_to(pad_mask, (batch, 1, seq_len, seq_len))
    out_p, w_p = scaled_dot_product_attention(q, k, v, pad_mask)
    out_p = jax.block_until_ready(out_p)
    ref_out_p, ref_w_p = _reference(q, k, v, pad_mask, scale)
    assert jnp.allclose(out_p, ref_out_p, atol=1e-5, rtol=1e-5), "output mismatch (pad)"
    assert jnp.allclose(w_p, ref_w_p, atol=1e-5, rtol=1e-5), "weights mismatch (pad)"

    # 3) no-mask path (no mask array is read at all)
    out2, w2 = scaled_dot_product_attention(q, k, v, None)
    out2 = jax.block_until_ready(out2)
    ref_out2, ref_w2 = _reference(q, k, v, None, scale)
    assert jnp.allclose(out2, ref_out2, atol=1e-5, rtol=1e-5), "output mismatch (no mask)"
    assert jnp.allclose(w2, ref_w2, atol=1e-5, rtol=1e-5), "weights mismatch (no mask)"

    print("KERNEL_OK")
</pallas_src>

<mosaic_0001>
module attributes {stable_mosaic.version = 11 : i64} {
  func.func @_sdpa_kernel_masked(%arg0: i32, %arg1: i32, %arg2: memref<1x8x32xf32, #tpu.memory_space<vmem>>, %arg3: memref<1x8x32xf32, #tpu.memory_space<vmem>>, %arg4: memref<1x8x32xf32, #tpu.memory_space<vmem>>, %arg5: memref<1x8x8xf32, #tpu.memory_space<vmem>>, %arg6: memref<1x8x32xf32, #tpu.memory_space<vmem>>, %arg7: memref<1x8x8xf32, #tpu.memory_space<vmem>>) attributes {dimension_semantics = [#tpu.dimension_semantics<parallel>, #tpu.dimension_semantics<parallel>], iteration_bounds = array<i64: 4, 1>, scalar_prefetch = 0 : i64, scratch_operands = 0 : i64, tpu.core_type = #tpu.core_type<tc>, window_params = [{transform_indices = @transform_0, window_bounds = array<i64: 1, 8, 32>}, {transform_indices = @transform_1, window_bounds = array<i64: 1, 8, 32>}, {transform_indices = @transform_2, window_bounds = array<i64: 1, 8, 32>}, {transform_indices = @transform_3, window_bounds = array<i64: 1, 8, 8>}, {transform_indices = @transform_4, window_bounds = array<i64: 1, 8, 32>}, {transform_indices = @transform_5, window_bounds = array<i64: 1, 8, 8>}]} {
    %c0 = arith.constant 0 : index
    %c0_0 = arith.constant 0 : index
    %c0_1 = arith.constant 0 : index
    %0 = vector.load %arg2[%c0, %c0_0, %c0_1] : memref<1x8x32xf32, #tpu.memory_space<vmem>>, vector<1x8x32xf32>
    %1 = vector.shape_cast %0 : vector<1x8x32xf32> to vector<8x32xf32>
    %c0_2 = arith.constant 0 : index
    %c0_3 = arith.constant 0 : index
    %c0_4 = arith.constant 0 : index
    %2 = vector.load %arg3[%c0_2, %c0_3, %c0_4] : memref<1x8x32xf32, #tpu.memory_space<vmem>>, vector<1x8x32xf32>
    %3 = vector.shape_cast %2 : vector<1x8x32xf32> to vector<8x32xf32>
    %c0_5 = arith.constant 0 : index
    %c0_6 = arith.constant 0 : index
    %c0_7 = arith.constant 0 : index
    %4 = vector.load %arg4[%c0_5, %c0_6, %c0_7] : memref<1x8x32xf32, #tpu.memory_space<vmem>>, vector<1x8x32xf32>
    %5 = vector.shape_cast %4 : vector<1x8x32xf32> to vector<8x32xf32>
    %cst = arith.constant dense<0.000000e+00> : vector<8x8xf32>
    %6 = tpu.matmul %1, %3, %cst {dimension_numbers = #tpu.dot_dimension_numbers<[1], [1], [0], [0], [0, 0, 1, 0], [], []>} : vector<8x32xf32>, vector<8x32xf32>, vector<8x8xf32> -> vector<8x8xf32>
    %cst_8 = arith.constant 0.176776692 : f32
    %7 = vector.broadcast %cst_8 : f32 to vector<8x8xf32>
    %8 = arith.mulf %6, %7 : vector<8x8xf32>
    %c0_9 = arith.constant 0 : index
    %c0_10 = arith.constant 0 : index
    %c0_11 = arith.constant 0 : index
    %9 = vector.load %arg5[%c0_9, %c0_10, %c0_11] : memref<1x8x8xf32, #tpu.memory_space<vmem>>, vector<1x8x8xf32>
    %10 = vector.shape_cast %9 : vector<1x8x8xf32> to vector<8x8xf32>
    %cst_12 = arith.constant 0.000000e+00 : f32
    %11 = vector.broadcast %cst_12 : f32 to vector<8x8xf32>
    %12 = arith.cmpf oeq, %10, %11 : vector<8x8xf32>
    %cst_13 = arith.constant -1.000000e+09 : f32
    %13 = vector.broadcast %cst_13 : f32 to vector<8x8xf32>
    %14 = arith.select %12, %13, %8 : vector<8x8xi1>, vector<8x8xf32>
    %cst_14 = arith.constant dense<0xFF800000> : vector<8xf32>
    %15 = vector.multi_reduction <maximumf>, %14, %cst_14 [1] : vector<8x8xf32> to vector<8xf32>
    %16 = vector.shape_cast %15 : vector<8xf32> to vector<8x1xf32>
    %17 = vector.broadcast %16 : vector<8x1xf32> to vector<8x8xf32>
    %18 = arith.subf %14, %17 : vector<8x8xf32>
    %19 = math.exp %18 : vector<8x8xf32>
    %cst_15 = arith.constant dense<0.000000e+00> : vector<8xf32>
    %20 = vector.multi_reduction <add>, %19, %cst_15 [1] : vector<8x8xf32> to vector<8xf32>
    %21 = vector.shape_cast %20 : vector<8xf32> to vector<8x1xf32>
    %22 = tpu.reciprocal %21 : vector<8x1xf32> -> vector<8x1xf32>
    %23 = vector.broadcast %22 : vector<8x1xf32> to vector<8x8xf32>
    %24 = arith.mulf %19, %23 : vector<8x8xf32>
    %cst_16 = arith.constant dense<0.000000e+00> : vector<8x32xf32>
    %25 = tpu.matmul %24, %5, %cst_16 {dimension_numbers = #tpu.dot_dimension_numbers<[1], [0], [0], [1], [0, 0, 1, 1], [], []>} : vector<8x8xf32>, vector<8x32xf32>, vector<8x32xf32> -> vector<8x32xf32>
    %c0_17 = arith.constant 0 : index
    %c0_18 = arith.constant 0 : index
    %c0_19 = arith.constant 0 : index
    %26 = vector.load %arg6[%c0_17, %c0_18, %c0_19] : memref<1x8x32xf32, #tpu.memory_space<vmem>>, vector<1x8x32xf32>
    %27 = vector.shape_cast %26 : vector<1x8x32xf32> to vector<8x32xf32>
    %28 = vector.shape_cast %25 : vector<8x32xf32> to vector<1x8x32xf32>
    tpu.vector_store %arg6[%c0_17, %c0_18, %c0_19], %28 {strides = array<i32>} : memref<1x8x32xf32, #tpu.memory_space<vmem>>, vector<1x8x32xf32>,
    %c0_20 = arith.constant 0 : index
    %c0_21 = arith.constant 0 : index
    %c0_22 = arith.constant 0 : index
    %29 = vector.load %arg7[%c0_20, %c0_21, %c0_22] : memref<1x8x8xf32, #tpu.memory_space<vmem>>, vector<1x8x8xf32>
    %30 = vector.shape_cast %29 : vector<1x8x8xf32> to vector<8x8xf32>
    %31 = vector.shape_cast %24 : vector<8x8xf32> to vector<1x8x8xf32>
    tpu.vector_store %arg7[%c0_20, %c0_21, %c0_22], %31 {strides = array<i32>} : memref<1x8x8xf32, #tpu.memory_space<vmem>>, vector<1x8x8xf32>,
    return
  }
  func.func @transform_0(%arg0: i32, %arg1: i32) -> (i32, i32, i32) {
    %c0_i32 = arith.constant 0 : i32
    %c0_i32_0 = arith.constant 0 : i32
    return %arg0, %arg1, %c0_i32 : i32, i32, i32
  }
  func.func @transform_1(%arg0: i32, %arg1: i32) -> (i32, i32, i32) {
    %c0_i32 = arith.constant 0 : i32
    %c0_i32_0 = arith.constant 0 : i32
    %c0_i32_1 = arith.constant 0 : i32
    return %arg0, %c0_i32, %c0_i32_0 : i32, i32, i32
  }
  func.func @transform_2(%arg0: i32, %arg1: i32) -> (i32, i32, i32) {
    %c0_i32 = arith.constant 0 : i32
    %c0_i32_0 = arith.constant 0 : i32
    %c0_i32_1 = arith.constant 0 : i32
    return %arg0, %c0_i32, %c0_i32_0 : i32, i32, i32
  }
  func.func @transform_3(%arg0: i32, %arg1: i32) -> (i32, i32, i32) {
    %c0_i32 = arith.constant 0 : i32
    %c0_i32_0 = arith.constant 0 : i32
    %c0_i32_1 = arith.constant 0 : i32
    return %c0_i32, %arg1, %c0_i32_0 : i32, i32, i32
  }
  func.func @transform_4(%arg0: i32, %arg1: i32) -> (i32, i32, i32) {
    %c0_i32 = arith.constant 0 : i32
    %c0_i32_0 = arith.constant 0 : i32
    return %arg0, %arg1, %c0_i32 : i32, i32, i32
  }
  func.func @transform_5(%arg0: i32, %arg1: i32) -> (i32, i32, i32) {
    %c0_i32 = arith.constant 0 : i32
    %c0_i32_0 = arith.constant 0 : i32
    return %arg0, %arg1, %c0_i32 : i32, i32, i32
  }
}

</mosaic_0001>

<llo_original>
// kernel: tpu_custom_call.1
$region0: #{tpu_custom_call.1}
  #allocation0 [shape = 'u32[]', space=smem, size = 0x4, offset = 0x4, fixed_abs, tag = 'smem constant byte address 0x4 - core index']
  #allocation1 [shape = 'u32[144,128]{1,0:T(1,128)}', space=vmem, size = 0x12000, scoped, tag = 'internal scratch']
  %s0 = inlined_call_operand.hbm [shape: f32[4,8,32], index: 0, kind: input, shape index: {}]
  %s1 = inlined_call_operand.hbm [shape: f32[4,8,32], index: 1, kind: input, shape index: {}]
  %s2 = inlined_call_operand.hbm [shape: f32[4,8,32], index: 2, kind: input, shape index: {}]
  %s3 = inlined_call_operand.vmem [shape: f32[1,8,8], index: 3, kind: input, shape index: {}]
  %s4 = inlined_call_operand.hbm [shape: f32[4,8,32], index: 4, kind: output, shape index: {0}]
  %s5 = inlined_call_operand.hbm [shape: f32[4,8,8], index: 5, kind: output, shape index: {1}]
  %6 = xla_tuple %s4, %s5
  %s7 = sld [smem:[#allocation0]]
  $region69: #{tpu_custom_call.1} parent=0
    _
  %s9 = ssub.s32 1, %s7
  %s10 = scalar_select 0, %s9, %s7
  $region1: #{tpu_custom_call.1} parent=0
    #allocation2 [shape = 'u8[8192]{0}', space=vmem, size = 0x2000, scoped, tag = 'input window, operand 0']
    #allocation3 [shape = 's32[2]{0}', space=sflag, size = 0x8, scoped, tag = 'scoped memory for tpu_custom_call.1']
    #allocation4 [shape = 's32[2]{0}', space=sflag, size = 0x8, scoped, tag = 'scoped memory for tpu_custom_call.1']
    #allocation5 [shape = 'u8[8192]{0}', space=vmem, size = 0x2000, scoped, tag = 'input window, operand 1']
    #allocation6 [shape = 's32[2]{0}', space=sflag, size = 0x8, scoped, tag = 'scoped memory for tpu_custom_call.1']
    #allocation7 [shape = 'u8[8192]{0}', space=vmem, size = 0x2000, scoped, tag = 'input window, operand 2']
    #allocation8 [shape = 'u8[8192]{0}', space=vmem, size = 0x2000, scoped, tag = 'output window, operand 0']
    #allocation9 [shape = 'u8[8192]{0}', space=vmem, size = 0x2000, scoped, tag = 'output window, operand 1']
    #allocation10 [shape = 's32[2]{0}', space=sflag, size = 0x8, scoped, tag = 'scoped memory for tpu_custom_call.1']
    %11 = vsyncpa [#allocation3], 0
    %s12 = scalar_lea.sflag [#allocation3], 1
    %13 = vsyncpa %s12, 0
    %14 = vsyncpa [#allocation6], 0
    %s15 = scalar_lea.sflag [#allocation6], 1
    %16 = vsyncpa %s15, 0
    %17 = vsyncpa [#allocation4], 0
    %s18 = scalar_lea.sflag [#allocation4], 1
    %19 = vsyncpa %s18, 0
    %20 = vsyncpa [#allocation10], 0
    %s21 = scalar_lea.sflag [#allocation10], 1
    %22 = vsyncpa %s21, 0
    loop: start=0, step=1, limit=6
    $region2: #{tpu_custom_call.1} parent=1 // loop_pre_header
      _
    $region3: #{tpu_custom_call.1} parent=1 // loop_header
      %s24 = sphi 0, %s28
      %p25 = scmp.ge.s32.totalorder %s24, 6
      %s31 = sphi 0, %s43
      %s32 = sphi 0, %s39
      %s33 = sphi 0, %s31
      %s34 = sphi 0, %s32
      %s35 = sphi 0, %s33
      %s36 = sphi 0, %s34
      %s48 = sphi 0, %s50
      %s51 = sphi 0, %s48
      %s52 = sphi 0, %s51
      %s68 = sphi 0, %s52
      %s74 = sphi 0, %s76
      %s77 = sphi 0, %s74
      %s78 = sphi 0, %s77
      %s94 = sphi 0, %s78
      %s100 = sphi 0, %s102
      %s103 = sphi 0, %s100
      %s104 = sphi 0, %s103
      %s120 = sphi 0, %s104
      %s126 = sphi 0, %s128
      %s129 = sphi 0, %s126
      %s130 = sphi 0, %s129
      %s146 = sphi 0, %s130
      %s154 = sphi 0, %s156
      %s157 = sphi 0, %s154
      %s158 = sphi 0, %s157
      %s174 = sphi 0, %s158
      %s182 = sphi 0, %s184
      %s185 = sphi 0, %s182
      %s186 = sphi 0, %s185
      %s202 = sphi 0, %s186
    $region4: #{tpu_custom_call.1} parent=1 // loop_header_branch
      %27 = sbr.rel (%p25) target = $region8
    $region5: #{tpu_custom_call.1} parent=1 // loop_body
      %s29 = ssub.s32 %s24, 1
      %s30 = ssub.s32 %s24, 2
      %s37 = sadd.s32 1, %s32
      %p38 = scmp.ge.s32.totalorder %s37, 1
      %s39 = scalar_select %p38, 0, %s37
      %s40 = sadd.s32 1, %s31
      %s41 = scalar_select %p38, %s40, %s31
      %p42 = scmp.ge.s32.totalorder %s41, 4
      %s43 = scalar_select %p42, 0, %s41
      %s44 = ssub.s32 %s31, %s43
      %s45 = ssub.s32 %s32, %s39
      %s46 = sor.u32 %s44, %s45
      %p47 = scmp.eq.s32.totalorder %s46, 0
      %s49 = sadd.s32 %s48, 1
      %s50 = scalar_select %p47, %s48, %s49
      %p53 = pneg %p47
      %p54 = scmp.eq.s32.totalorder %s24, 3
      %p55 = por %p53, %p54
      %p56 = scmp.ne.s32.totalorder %s48, %s51
      %p57 = scmp.eq.s32.totalorder %s24, 0
      %p58 = por %p56, %p57
      %p59 = scmp.ne.s32.totalorder %s48, %s51
      %p60 = scmp.eq.s32.totalorder %s29, 3
      %p61 = por %p59, %p60
      %p62 = scmp.ne.s32.totalorder %s51, %s52
      %p63 = scmp.eq.s32.totalorder %s29, 0
      %p64 = por %p62, %p63
      %p65 = scmp.ne.s32.totalorder %s51, %s52
      %p66 = scmp.eq.s32.totalorder %s30, 3
      %p67 = por %p65, %p66
      %p69 = scmp.ne.s32.totalorder %s52, %s68
      %p70 = scmp.eq.s32.totalorder %s30, 0
      %p71 = por %p69, %p70
      %s72 = ssub.s32 %s31, %s43
      %p73 = scmp.eq.s32.totalorder %s72, 0
      %s75 = sadd.s32 %s74, 1
      %s76 = scalar_select %p73, %s74, %s75
      %p79 = pneg %p73
      %p80 = scmp.eq.s32.totalorder %s24, 3
      %p81 = por %p79, %p80
      %p82 = scmp.ne.s32.totalorder %s74, %s77
      %p83 = scmp.eq.s32.totalorder %s24, 0
      %p84 = por %p82, %p83
      %p85 = scmp.ne.s32.totalorder %s74, %s77
      %p86 = scmp.eq.s32.totalorder %s29, 3
      %p87 = por %p85, %p86
      %p88 = scmp.ne.s32.totalorder %s77, %s78
      %p89 = scmp.eq.s32.totalorder %s29, 0
      %p90 = por %p88, %p89
      %p91 = scmp.ne.s32.totalorder %s77, %s78
      %p92 = scmp.eq.s32.totalorder %s30, 3
      %p93 = por %p91, %p92
      %p95 = scmp.ne.s32.totalorder %s78, %s94
      %p96 = scmp.eq.s32.totalorder %s30, 0
      %p97 = por %p95, %p96
      %s98 = ssub.s32 %s31, %s43
      %p99 = scmp.eq.s32.totalorder %s98, 0
      %s101 = sadd.s32 %s100, 1
      %s102 = scalar_select %p99, %s100, %s101
      %p105 = pneg %p99
      %p106 = scmp.eq.s32.totalorder %s24, 3
      %p107 = por %p105, %p106
      %p108 = scmp.ne.s32.totalorder %s100, %s103
      %p109 = scmp.eq.s32.totalorder %s24, 0
      %p110 = por %p108, %p109
      %p111 = scmp.ne.s32.totalorder %s100, %s103
      %p112 = scmp.eq.s32.totalorder %s29, 3
      %p113 = por %p111, %p112
      %p114 = scmp.ne.s32.totalorder %s103, %s104
      %p115 = scmp.eq.s32.totalorder %s29, 0
      %p116 = por %p114, %p115
      %p117 = scmp.ne.s32.totalorder %s103, %s104
      %p118 = scmp.eq.s32.totalorder %s30, 3
      %p119 = por %p117, %p118
      %p121 = scmp.ne.s32.totalorder %s104, %s120
      %p122 = scmp.eq.s32.totalorder %s30, 0
      %p123 = por %p121, %p122
      %s124 = ssub.s32 %s32, %s39
      %p125 = scmp.eq.s32.totalorder %s124, 0
      %s127 = sadd.s32 %s126, 1
      %s128 = scalar_select %p125, %s126, %s127
      %p131 = pneg %p125
      %p132 = scmp.eq.s32.totalorder %s24, 3
      %p133 = por %p131, %p132
      %p134 = scmp.ne.s32.totalorder %s126, %s129
      %p135 = scmp.eq.s32.totalorder %s24, 0
      %p136 = por %p134, %p135
      %p137 = scmp.ne.s32.totalorder %s126, %s129
      %p138 = scmp.eq.s32.totalorder %s29, 3
      %p139 = por %p137, %p138
      %p140 = scmp.ne.s32.totalorder %s129, %s130
      %p141 = scmp.eq.s32.totalorder %s29, 0
      %p142 = por %p140, %p141
      %p143 = scmp.ne.s32.totalorder %s129, %s130
      %p144 = scmp.eq.s32.totalorder %s30, 3
      %p145 = por %p143, %p144
      %p147 = scmp.ne.s32.totalorder %s130, %s146
      %p148 = scmp.eq.s32.totalorder %s30, 0
      %p149 = por %p147, %p148
      %s150 = ssub.s32 %s31, %s43
      %s151 = ssub.s32 %s32, %s39
      %s152 = sor.u32 %s150, %s151
      %p153 = scmp.eq.s32.totalorder %s152, 0
      %s155 = sadd.s32 %s154, 1
      %s156 = scalar_select %p153, %s154, %s155
      %p159 = pneg %p153
      %p160 = scmp.eq.s32.totalorder %s24, 3
      %p161 = por %p159, %p160
      %p162 = scmp.ne.s32.totalorder %s154, %s157
      %p163 = scmp.eq.s32.totalorder %s24, 0
      %p164 = por %p162, %p163
      %p165 = scmp.ne.s32.totalorder %s154, %s157
      %p166 = scmp.eq.s32.totalorder %s29, 3
      %p167 = por %p165, %p166
      %p168 = scmp.ne.s32.totalorder %s157, %s158
      %p169 = scmp.eq.s32.totalorder %s29, 0
      %p170 = por %p168, %p169
      %p171 = scmp.ne.s32.totalorder %s157, %s158
      %p172 = scmp.eq.s32.totalorder %s30, 3
      %p173 = por %p171, %p172
      %p175 = scmp.ne.s32.totalorder %s158, %s174
      %p176 = scmp.eq.s32.totalorder %s30, 0
      %p177 = por %p175, %p176
      %s178 = ssub.s32 %s31, %s43
      %s179 = ssub.s32 %s32, %s39
      %s180 = sor.u32 %s178, %s179
      %p181 = scmp.eq.s32.totalorder %s180, 0
      %s183 = sadd.s32 %s182, 1
      %s184 = scalar_select %p181, %s182, %s183
      %p187 = pneg %p181
      %p188 = scmp.eq.s32.totalorder %s24, 3
      %p189 = por %p187, %p188
      %p190 = scmp.ne.s32.totalorder %s182, %s185
      %p191 = scmp.eq.s32.totalorder %s24, 0
      %p192 = por %p190, %p191
      %p193 = scmp.ne.s32.totalorder %s182, %s185
      %p194 = scmp.eq.s32.totalorder %s29, 3
      %p195 = por %p193, %p194
      %p196 = scmp.ne.s32.totalorder %s185, %s186
      %p197 = scmp.eq.s32.totalorder %s29, 0
      %p198 = por %p196, %p197
      %p199 = scmp.ne.s32.totalorder %s185, %s186
      %p200 = scmp.eq.s32.totalorder %s30, 3
      %p201 = por %p199, %p200
      %p203 = scmp.ne.s32.totalorder %s186, %s202
      %p204 = scmp.eq.s32.totalorder %s30, 0
      %p205 = por %p203, %p204
      %p206 = scmp.le.s32.totalorder 1, %s24
      %p207 = scmp.lt.s32.totalorder %s24, 5
      %p208 = pnand %p206, %p207
      %p209 = pneg %p208
      // Predicated region
      $region9: #{tpu_custom_call.1} parent=5 // pred_check
        _
      $region10: #{tpu_custom_call.1} parent=5 // pred_check_branch
        %211 = sbr.rel (%p208) target = $region12
      $region11: #{tpu_custom_call.1} parent=5 // pred_region
        %s212 = ssub.s32 %s24, 1
        // Predicated region
        $region13: #{tpu_custom_call.1} parent=11 // pred_check
          %p213 = pneg %p142
        $region14: #{tpu_custom_call.1} parent=11 // pred_check_branch
          %215 = sbr.rel (%p213) target = $region16
        $region15: #{tpu_custom_call.1} parent=11 // pred_region
          %p216 = scmp.lt.s32.totalorder %s34, 0
          %s217 = scalar_select %p216, %s34, 0
          %s218 = smul.addr %s217, 8
          %s219 = scalar_lea.vmem %s3, %s218
        $region16: #{tpu_custom_call.1} parent=11 // pred_fallthru
          _
      $region12: #{tpu_custom_call.1} parent=5 // pred_fallthru
        _
      %p220 = scmp.lt.s32.totalorder %s24, 4
      // Predicated region
      $region17: #{tpu_custom_call.1} parent=5 // pred_check
        %p221 = pneg %p220
      $region18: #{tpu_custom_call.1} parent=5 // pred_check_branch
        %223 = sbr.rel (%p221) target = $region20
      $region19: #{tpu_custom_call.1} parent=5 // pred_region
        // Predicated region
        $region21: #{tpu_custom_call.1} parent=19 // pred_check
          %p224 = pneg %p58
        $region22: #{tpu_custom_call.1} parent=19 // pred_check_branch
          %226 = sbr.rel (%p224) target = $region24
        $region23: #{tpu_custom_call.1} parent=19 // pred_region
          %s227 = sand.u32 %s48, 1
          %s228 = scalar_lea.sflag [#allocation3], %s227
          %s229 = sand.u32 %s48, 1
          %s230 = smul.addr %s229, 8
          %s231 = scalar_lea.vmem [#allocation2], %s230
          %s233 = ssub.s32 128, 128
          %234 = vsyncadd %s228, %s233
          %s235 = sadd.s32 %s32, %s31
          %s236 = smul.addr %s235, 128
          %s237 = scalar_lea.hbm %s0, %s236
          %s239 = sshll.u32 %s231, 4
          %s240 = int_to_ptr.vmem [resolvable:$true] %s239
          %242 = dma.hbm_to_vmem [thread:$0]  %s237, 128, %s240, %s228
        $region24: #{tpu_custom_call.1} parent=19 // pred_fallthru
          _
        // Predicated region
        $region25: #{tpu_custom_call.1} parent=19 // pred_check
          %p243 = pneg %p84
        $region26: #{tpu_custom_call.1} parent=19 // pred_check_branch
          %245 = sbr.rel (%p243) target = $region28
        $region27: #{tpu_custom_call.1} parent=19 // pred_region
          %s246 = sand.u32 %s24, 1
          %s247 = scalar_lea.sflag [#allocation6], %s246
          %s248 = sand.u32 %s74, 1
          %s249 = smul.addr %s248, 8
          %s250 = scalar_lea.vmem [#allocation5], %s249
          %s252 = ssub.s32 128, 128
          %253 = vsyncadd %s247, %s252
          %s254 = smul.addr %s31, 128
          %s255 = scalar_lea.hbm %s1, %s254
          %s257 = sshll.u32 %s250, 4
          %s258 = int_to_ptr.vmem [resolvable:$true] %s257
          %260 = dma.hbm_to_vmem [thread:$0]  %s255, 128, %s258, %s247
        $region28: #{tpu_custom_call.1} parent=19 // pred_fallthru
          _
        // Predicated region
        $region29: #{tpu_custom_call.1} parent=19 // pred_check
          %p261 = pneg %p110
        $region30: #{tpu_custom_call.1} parent=19 // pred_check_branch
          %263 = sbr.rel (%p261) target = $region32
        $region31: #{tpu_custom_call.1} parent=19 // pred_region
          %s264 = sand.u32 %s24, 1
          %s265 = scalar_lea.sflag [#allocation6], %s264
          %s266 = sand.u32 %s100, 1
          %s267 = smul.addr %s266, 8
          %s268 = scalar_lea.vmem [#allocation7], %s267
          %s270 = ssub.s32 128, 128
          %271 = vsyncadd %s265, %s270
          %s272 = smul.addr %s31, 128
          %s273 = scalar_lea.hbm %s2, %s272
          %s275 = sshll.u32 %s268, 4
          %s276 = int_to_ptr.vmem [resolvable:$true] %s275
          %278 = dma.hbm_to_vmem [thread:$0]  %s273, 128, %s276, %s265
        $region32: #{tpu_custom_call.1} parent=19 // pred_fallthru
          _
      $region20: #{tpu_custom_call.1} parent=5 // pred_fallthru
        _
      %p279 = scmp.le.s32.totalorder 1, %s24
      %p280 = scmp.lt.s32.totalorder %s24, 5
      %p281 = pnand %p279, %p280
      %p282 = pneg %p281
      // Predicated region
      $region33: #{tpu_custom_call.1} parent=5 // pred_check
        _
      $region34: #{tpu_custom_call.1} parent=5 // pred_check_branch
        %284 = sbr.rel (%p281) target = $region36
      $region35: #{tpu_custom_call.1} parent=5 // pred_region
        %s285 = ssub.s32 %s24, 1
        %s286 = sand.u32 %s51, 1
        %s287 = scalar_lea.sflag [#allocation3], %s286
        %s288 = sand.u32 %s51, 1
        %s289 = smul.addr %s288, 8
        %s290 = scalar_lea.vmem [#allocation2], %s289
        // Predicated region
        $region37: #{tpu_custom_call.1} parent=35 // pred_check
          %p291 = pneg %p64
        $region38: #{tpu_custom_call.1} parent=35 // pred_check_branch
          %293 = sbr.rel (%p291) target = $region40
        $region39: #{tpu_custom_call.1} parent=35 // pred_region
          %294 = dma.done %s287, 128
        $region40: #{tpu_custom_call.1} parent=35 // pred_fallthru
          _
        %s295 = sand.u32 %s29, 1
        %s296 = scalar_lea.sflag [#allocation6], %s295
        %s297 = sand.u32 %s77, 1
        %s298 = smul.addr %s297, 8
        %s299 = scalar_lea.vmem [#allocation5], %s298
        // Predicated region
        $region41: #{tpu_custom_call.1} parent=35 // pred_check
          %p300 = pneg %p90
        $region42: #{tpu_custom_call.1} parent=35 // pred_check_branch
          %302 = sbr.rel (%p300) target = $region44
        $region43: #{tpu_custom_call.1} parent=35 // pred_region
          %303 = dma.done %s296, 128
        $region44: #{tpu_custom_call.1} parent=35 // pred_fallthru
          _
        %s304 = sand.u32 %s29, 1
        %s305 = scalar_lea.sflag [#allocation6], %s304
        %s306 = sand.u32 %s103, 1
        %s307 = smul.addr %s306, 8
        %s308 = scalar_lea.vmem [#allocation7], %s307
        // Predicated region
        $region45: #{tpu_custom_call.1} parent=35 // pred_check
          %p309 = pneg %p116
        $region46: #{tpu_custom_call.1} parent=35 // pred_check_branch
          %311 = sbr.rel (%p309) target = $region48
        $region47: #{tpu_custom_call.1} parent=35 // pred_region
          %312 = dma.done %s305, 128
        $region48: #{tpu_custom_call.1} parent=35 // pred_fallthru
          _
        %s313 = sand.u32 %s51, 1
        %s314 = scalar_lea.sflag [#allocation3], %s313
        %s315 = sand.u32 %s51, 1
        %s316 = smul.addr %s315, 8
        %s317 = scalar_lea.vmem [#allocation2], %s316
        %p318 = pneg %p64
        %p319 = pneg %p61
        %s320 = sand.u32 %s29, 1
        %s321 = scalar_lea.sflag [#allocation6], %s320
        %s322 = sand.u32 %s77, 1
        %s323 = smul.addr %s322, 8
        %s324 = scalar_lea.vmem [#allocation5], %s323
        %p325 = pneg %p90
        %p326 = pneg %p87
        %s327 = sand.u32 %s29, 1
        %s328 = scalar_lea.sflag [#allocation6], %s327
        %s329 = sand.u32 %s103, 1
        %s330 = smul.addr %s329, 8
        %s331 = scalar_lea.vmem [#allocation7], %s330
        %p332 = pneg %p116
        %p333 = pneg %p113
        %p334 = scmp.lt.s32.totalorder %s34, 0
        %s335 = scalar_select %p334, %s34, 0
        %s336 = smul.addr %s335, 8
        %s337 = scalar_lea.vmem %s3, %s336
        %p338 = pneg %p142
        %p339 = pneg %p139
        %p340 = pneg %p170
        %p341 = pneg %p167
        %s342 = sand.u32 %s157, 1
        %s343 = scalar_lea.sflag [#allocation4], %s342
        %s344 = sand.u32 %s157, 1
        %s345 = smul.addr %s344, 8
        %s346 = scalar_lea.vmem [#allocation8], %s345
        %p347 = pneg %p198
        %p348 = pneg %p195
        %s349 = sand.u32 %s185, 1
        %s350 = scalar_lea.sflag [#allocation10], %s349
        %s351 = sand.u32 %s185, 1
        %s352 = smul.addr %s351, 8
        %s353 = scalar_lea.vmem [#allocation9], %s352
        %p354 = scmp.lt.s32.totalorder %s34, 0
        %s355 = scalar_select %p354, %s34, 0
        %s356 = smul.addr %s355, 8
        %s357 = scalar_lea.vmem %s3, %s356
        %v358 = vld [vmem:[%s290] sm:$0xff]
        %v359 = vld [vmem:[%s299] sm:$0xff]
        %v360 = vld [vmem:[%s308] sm:$0xff]
        %vm361 = vcmask 261120
        %v363 = vsel %vm361, %v358, 0
        %v366 = vsel %vm361, %v359, 0
        %368 = vmatprep.subr.mxu0 0.0
        %369 = vmatpush1.xpose.msra.mxu0 %v366
        %370 = vmatprep.subr.mxu0 0.0
        %371 = vmatpush1.xpose.msra.mxu0 0.0
        %372 = vmatprep.subr.mxu0 0.0
        %373 = vmatpush1.xpose.msra.mxu0 0.0
        %374 = vmatprep.subr.mxu0 0.0
        %375 = vmatpush1.xpose.msra.mxu0 0.0
        %376 = vmatprep.subr.mxu0 0.0
        %377 = vmatpush1.xpose.msra.mxu0 0.0
        %378 = vmatprep.subr.mxu0 0.0
        %379 = vmatpush1.xpose.msra.mxu0 0.0
        %380 = vmatprep.subr.mxu0 0.0
        %381 = vmatpush1.xpose.msra.mxu0 0.0
        %382 = vmatprep.subr.mxu0 0.0
        %383 = vmatpush1.xpose.msra.mxu0 0.0
        %384 = vmatprep.subr.mxu0 0.0
        %385 = vmatpush1.xpose.msra.mxu0 0.0
        %386 = vmatprep.subr.mxu0 0.0
        %387 = vmatpush1.xpose.msra.mxu0 0.0
        %388 = vmatprep.subr.mxu0 0.0
        %389 = vmatpush1.xpose.msra.mxu0 0.0
        %390 = vmatprep.subr.mxu0 0.0
        %391 = vmatpush1.xpose.msra.mxu0 0.0
        %392 = vmatprep.subr.mxu0 0.0
        %393 = vmatpush1.xpose.msra.mxu0 0.0
        %394 = vmatprep.subr.mxu0 0.0
        %395 = vmatpush1.xpose.msra.mxu0 0.0
        %396 = vmatprep.subr.mxu0 0.0
        %397 = vmatpush1.xpose.msra.mxu0 0.0
        %398 = vmatprep.subr.mxu0 0.0
        %399 = vmatpush1.xpose.msra.mxu0 0.0
        %400 = vmatprep.subr.mxu0 0.0
        %401 = vmatpush1.xpose.msra.mxu0 0.0
        %402 = vmatprep.subr.mxu0 0.0
        %403 = vmatpush1.xpose.msra.mxu0 0.0
        %404 = vmatprep.subr.mxu0 0.0
        %405 = vmatpush1.xpose.msra.mxu0 0.0
        %406 = vmatprep.subr.mxu0 0.0
        %407 = vmatpush1.xpose.msra.mxu0 0.0
        %408 = vmatprep.subr.mxu0 0.0
        %409 = vmatpush1.xpose.msra.mxu0 0.0
        %410 = vmatprep.subr.mxu0 0.0
        %411 = vmatpush1.xpose.msra.mxu0 0.0
        %412 = vmatprep.subr.mxu0 0.0
        %413 = vmatpush1.xpose.msra.mxu0 0.0
        %414 = vmatprep.subr.mxu0 0.0
        %415 = vmatpush1.xpose.msra.mxu0 0.0
        %416 = vmatprep.subr.mxu0 0.0
        %417 = vmatpush1.xpose.msra.mxu0 0.0
        %418 = vmatprep.subr.mxu0 0.0
        %419 = vmatpush1.xpose.msra.mxu0 0.0
        %420 = vmatprep.subr.mxu0 0.0
        %421 = vmatpush1.xpose.msra.mxu0 0.0
        %422 = vmatprep.subr.mxu0 0.0
        %423 = vmatpush1.xpose.msra.mxu0 0.0
        %424 = vmatprep.subr.mxu0 0.0
        %425 = vmatpush1.xpose.msra.mxu0 0.0
        %426 = vmatprep.subr.mxu0 0.0
        %427 = vmatpush1.xpose.msra.mxu0 0.0
        %428 = vmatprep.subr.mxu0 0.0
        %429 = vmatpush1.xpose.msra.mxu0 0.0
        %430 = vmatprep.subr.mxu0 0.0
        %431 = vmatpush1.xpose.msra.mxu0 0.0
        %432 = vmatprep.mubr.f32.mxu0 0.0
        %433 = vmatmul.mubr.f32.gmra.mrb[0].mxu0 %v363
        %v434 = vpop.f32.mrb[0].mxu0
        %v435 = vadd.f32 0.0, %v434
        %v436 = vpop.f32.mrb[0].mxu0
        %437 = vdwg.mxu0
        %v438 = vmul.f32 %v435, 0.17677669
        %v439 = vld [vmem:[%s357] sm:$0xff]
        %vm440 = vcmp.eq.f32.partialorder %v439, 0.0
        %v441 = vsel %vm440, -1e+09, %v438
        %vm442 = vcmask 64512
        %v443 = vsel %vm442, %v441, -inf
        %444 = vmax.xlane.f32.xlu0 %v443
        %v445 = vpop.xlane.xlu0 %444
        %v446 = vsub.f32 %v441, %v445
        %v447 = vmul.f32 %v446, 1.442695
        %v448 = vpow.pop %v447
        %v449 = vsel %vm442, %v448, 0.0
        %450 = vadd.xlane.f32.xlu0 %v449
        %v451 = vpop.xlane.xlu0 %450
        %v452 = vrcp.pop %v451
        %v453 = vmul.f32 %v448, %v452
        %v455 = vsel %vm442, %v453, 0
        %457 = vmatprep.subr.mxu0 0.0
        %458 = vmatpush1.msra.mxu0 %v360
        %459 = vmatprep.subr.mxu0 0.0
        %460 = vmatpush1.msra.mxu0 0.0
        %461 = vmatprep.subr.mxu0 0.0
        %462 = vmatpush1.msra.mxu0 0.0
        %463 = vmatprep.subr.mxu0 0.0
        %464 = vmatpush1.msra.mxu0 0.0
        %465 = vmatprep.subr.mxu0 0.0
        %466 = vmatpush1.msra.mxu0 0.0
        %467 = vmatprep.subr.mxu0 0.0
        %468 = vmatpush1.msra.mxu0 0.0
        %469 = vmatprep.subr.mxu0 0.0
        %470 = vmatpush1.msra.mxu0 0.0
        %471 = vmatprep.subr.mxu0 0.0
        %472 = vmatpush1.msra.mxu0 0.0
        %473 = vmatprep.subr.mxu0 0.0
        %474 = vmatpush1.msra.mxu0 0.0
        %475 = vmatprep.subr.mxu0 0.0
        %476 = vmatpush1.msra.mxu0 0.0
        %477 = vmatprep.subr.mxu0 0.0
        %478 = vmatpush1.msra.mxu0 0.0
        %479 = vmatprep.subr.mxu0 0.0
        %480 = vmatpush1.msra.mxu0 0.0
        %481 = vmatprep.subr.mxu0 0.0
        %482 = vmatpush1.msra.mxu0 0.0
        %483 = vmatprep.subr.mxu0 0.0
        %484 = vmatpush1.msra.mxu0 0.0
        %485 = vmatprep.subr.mxu0 0.0
        %486 = vmatpush1.msra.mxu0 0.0
        %487 = vmatprep.subr.mxu0 0.0
        %488 = vmatpush1.msra.mxu0 0.0
        %489 = vmatprep.subr.mxu0 0.0
        %490 = vmatpush1.msra.mxu0 0.0
        %491 = vmatprep.subr.mxu0 0.0
        %492 = vmatpush1.msra.mxu0 0.0
        %493 = vmatprep.subr.mxu0 0.0
        %494 = vmatpush1.msra.mxu0 0.0
        %495 = vmatprep.subr.mxu0 0.0
        %496 = vmatpush1.msra.mxu0 0.0
        %497 = vmatprep.subr.mxu0 0.0
        %498 = vmatpush1.msra.mxu0 0.0
        %499 = vmatprep.subr.mxu0 0.0
        %500 = vmatpush1.msra.mxu0 0.0
        %501 = vmatprep.subr.mxu0 0.0
        %502 = vmatpush1.msra.mxu0 0.0
        %503 = vmatprep.subr.mxu0 0.0
        %504 = vmatpush1.msra.mxu0 0.0
        %505 = vmatprep.subr.mxu0 0.0
        %506 = vmatpush1.msra.mxu0 0.0
        %507 = vmatprep.subr.mxu0 0.0
        %508 = vmatpush1.msra.mxu0 0.0
        %509 = vmatprep.subr.mxu0 0.0
        %510 = vmatpush1.msra.mxu0 0.0
        %511 = vmatprep.subr.mxu0 0.0
        %512 = vmatpush1.msra.mxu0 0.0
        %513 = vmatprep.subr.mxu0 0.0
        %514 = vmatpush1.msra.mxu0 0.0
        %515 = vmatprep.subr.mxu0 0.0
        %516 = vmatpush1.msra.mxu0 0.0
        %517 = vmatprep.subr.mxu0 0.0
        %518 = vmatpush1.msra.mxu0 0.0
        %519 = vmatprep.subr.mxu0 0.0
        %520 = vmatpush1.msra.mxu0 0.0
        %521 = vmatprep.mubr.f32.mxu0 0.0
        %522 = vmatmul.mubr.f32.gmra.mrb[0].mxu0 %v455
        %v523 = vpop.f32.mrb[0].mxu0
        %v524 = vadd.f32 0.0, %v523
        %v525 = vpop.f32.mrb[0].mxu0
        %526 = vdwg.mxu0
        %527 = vst.msk [vmem:[%s346] sm:$0xff] %vm361, %v524
        %528 = vst.msk [vmem:[%s353] sm:$0xff] %vm442, %v453
        %s529 = sand.u32 %s157, 1
        %s530 = scalar_lea.sflag [#allocation4], %s529
        %s531 = sand.u32 %s157, 1
        %s532 = smul.addr %s531, 8
        %s533 = scalar_lea.vmem [#allocation8], %s532
        %s534 = sand.u32 %s185, 1
        %s535 = scalar_lea.sflag [#allocation10], %s534
        %s536 = sand.u32 %s185, 1
        %s537 = smul.addr %s536, 8
        %s538 = scalar_lea.vmem [#allocation9], %s537
        // Predicated region
        $region49: #{tpu_custom_call.1} parent=35 // pred_check
          %p539 = pneg %p167
        $region50: #{tpu_custom_call.1} parent=35 // pred_check_branch
          %541 = sbr.rel (%p539) target = $region52
        $region51: #{tpu_custom_call.1} parent=35 // pred_region
          %s543 = ssub.s32 128, 128
          %544 = vsyncadd %s530, %s543
          %s545 = sadd.s32 %s34, %s33
          %s546 = smul.addr %s545, 128
          %s547 = scalar_lea.hbm %s4, %s546
          %s549 = sshll.u32 %s533, 4
          %s550 = int_to_ptr.vmem [resolvable:$true] %s549
          %552 = dma.vmem_to_hbm [thread:$0]  %s550, 128, %s547, %s530
        $region52: #{tpu_custom_call.1} parent=35 // pred_fallthru
          _
        // Predicated region
        $region53: #{tpu_custom_call.1} parent=35 // pred_check
          %p553 = pneg %p195
        $region54: #{tpu_custom_call.1} parent=35 // pred_check_branch
          %555 = sbr.rel (%p553) target = $region56
        $region55: #{tpu_custom_call.1} parent=35 // pred_region
          %s557 = ssub.s32 128, 128
          %558 = vsyncadd %s535, %s557
          %s559 = sadd.s32 %s34, %s33
          %s560 = smul.addr %s559, 128
          %s561 = scalar_lea.hbm %s5, %s560
          %s563 = sshll.u32 %s538, 4
          %s564 = int_to_ptr.vmem [resolvable:$true] %s563
          %566 = dma.vmem_to_hbm [thread:$0]  %s564, 128, %s561, %s535
        $region56: #{tpu_custom_call.1} parent=35 // pred_fallthru
          _
      $region36: #{tpu_custom_call.1} parent=5 // pred_fallthru
        _
      %p567 = scmp.le.s32.totalorder 2, %s24
      // Predicated region
      $region57: #{tpu_custom_call.1} parent=5 // pred_check
        %p568 = pneg %p567
      $region58: #{tpu_custom_call.1} parent=5 // pred_check_branch
        %570 = sbr.rel (%p568) target = $region60
      $region59: #{tpu_custom_call.1} parent=5 // pred_region
        %s571 = ssub.s32 %s24, 2
        // Predicated region
        $region61: #{tpu_custom_call.1} parent=59 // pred_check
          %p572 = pneg %p173
        $region62: #{tpu_custom_call.1} parent=59 // pred_check_branch
          %574 = sbr.rel (%p572) target = $region64
        $region63: #{tpu_custom_call.1} parent=59 // pred_region
          %s575 = sand.u32 %s158, 1
          %s576 = scalar_lea.sflag [#allocation4], %s575
          %s577 = sand.u32 %s158, 1
          %s578 = smul.addr %s577, 8
          %s579 = scalar_lea.vmem [#allocation8], %s578
          %580 = dma.done %s576, 128
        $region64: #{tpu_custom_call.1} parent=59 // pred_fallthru
          _
        // Predicated region
        $region65: #{tpu_custom_call.1} parent=59 // pred_check
          %p581 = pneg %p201
        $region66: #{tpu_custom_call.1} parent=59 // pred_check_branch
          %583 = sbr.rel (%p581) target = $region68
        $region67: #{tpu_custom_call.1} parent=59 // pred_region
          %s584 = sand.u32 %s186, 1
          %s585 = scalar_lea.sflag [#allocation10], %s584
          %s586 = sand.u32 %s186, 1
          %s587 = smul.addr %s586, 8
          %s588 = scalar_lea.vmem [#allocation9], %s587
          %589 = dma.done %s585, 128
        $region68: #{tpu_custom_call.1} parent=59 // pred_fallthru
          _
      $region60: #{tpu_custom_call.1} parent=5 // pred_fallthru
        _
    $region6: #{tpu_custom_call.1} parent=1 // loop_footer
      %s28 = sadd.s32 1, %s24
    $region7: #{tpu_custom_call.1} parent=1 // loop_footer_branch
      %23 = sbr.rel target = $region3
    $region8: #{tpu_custom_call.1} parent=1 // loop_exit
      _
    %590 = vsyncpa [#allocation3], 1
    %s591 = scalar_lea.sflag [#allocation3], 1
    %592 = vsyncpa %s591, 1
    %593 = vsyncpa [#allocation6], 1
    %s594 = scalar_lea.sflag [#allocation6], 1
    %595 = vsyncpa %s594, 1
    %596 = vsyncpa [#allocation4], 1
    %s597 = scalar_lea.sflag [#allocation4], 1
    %598 = vsyncpa %s597, 1
    %599 = vsyncpa [#allocation10], 1
    %s600 = scalar_lea.sflag [#allocation10], 1
    %601 = vsyncpa %s600, 1

</llo_original>
